<compile_context>
chip_gen: v6e
topology: v6e:2x2x1
jax: 0.10.0
libtpu: 0.0.40
codegen_flags: <defaults>
</compile_context>

<pallas_src>
import functools

import jax
import jax.numpy as jnp
from jax import lax
from jax.experimental import pallas as pl
from jax.experimental.pallas import tpu as pltpu

SMOOTH = 1e-3
P_EXP = 2                              # DiceLoss(p=2)
LANES = 128
ALIGN_ROWS = 32                        # lcm of f32/bf16/int8 sublane packing
TARGET_STEP_BYTES = 8 * 1024 * 1024    # HBM bytes (both inputs) per grid step
SUB_ROWS = 1024                        # in-kernel compute chunk (bounds VMEM temps)
VMEM_LIMIT_BYTES = 32 * 1024 * 1024    # raises v5e's 16 MiB default; = default v6e/v7x


def _pack_rows(dtype):
    # Sublane packing granularity: f32 -> 8, bf16 -> 16, int8/uint8 -> 32.
    return 8 * max(1, 4 // jnp.dtype(dtype).itemsize)


def _default_num_core_slices():
    # 1 on single-TensorCore parts (v5e / v6e), 2 on multi-TC parts (v7x,
    # megacore).  Falling back to 1 is always safe/correct.
    try:
        kind = jax.devices()[0].device_kind.lower()
    except Exception:
        return 1
    single_tc = any(tag in kind for tag in
                    ("v5 lite", "v5e", "v5litepod", "v6 lite", "v6e"))
    return 1 if single_tc else 2


def _to_f32(x):
    # Integer inputs (e.g. bool targets streamed as int8) go via int32 to keep
    # the Mosaic convert path maximally well-trodden; floats convert directly.
    if jnp.issubdtype(x.dtype, jnp.integer):
        return x.astype(jnp.int32).astype(jnp.float32)
    return x.astype(jnp.float32)


def _pow_term(x, p_exp):
    # Small integer p -> repeated multiplies (VPU); otherwise jnp.power (EUP).
    if isinstance(p_exp, int) and 1 <= p_exp <= 4:
        r = x
        for _ in range(p_exp - 1):
            r = r * x
        return r
    return jnp.power(x, p_exp)


def _dice_kernel(pred_ref, targ_ref, acc_ref, *, p_exp, block_rows,
                 blocks_per_slice, valid_rows, last_block,
                 tail_overhangs, has_dup_blocks):
    """Partial-sum kernel.

    pred_ref/targ_ref: (block_rows, LANES) VMEM tiles (native input dtype).
    acc_ref:           (2, 8, LANES) f32 output block, resident across the
                       inner (arbitrary) grid axis:
                         acc_ref[0] accumulates partials of sum(p * t)
                         acc_ref[1] accumulates partials of sum(p^p + t^p)
    """
    p_id = pl.program_id(0)
    j = pl.program_id(1)
    b = p_id * blocks_per_slice + j          # logical block index

    @pl.when(j == 0)
    def _():
        acc_ref[...] = jnp.zeros_like(acc_ref)

    def chunk(row0, nrows, masked):
        pred = _to_f32(pred_ref[pl.ds(row0, nrows), :])
        targ = _to_f32(targ_ref[pl.ds(row0, nrows), :])
        if masked:
            # Compare against (valid_rows - row0): iota stays a constant, no
            # per-chunk vector add.  Only runs on the overhanging block.
            limit = valid_rows - (b * block_rows + row0)
            row_ids = lax.broadcasted_iota(jnp.int32, (nrows, LANES), 0)
            keep = row_ids < limit
            pred = jnp.where(keep, pred, 0.0)
            targ = jnp.where(keep, targ, 0.0)
        prod = pred * targ
        pow_sum = _pow_term(pred, p_exp) + _pow_term(targ, p_exp)
        # Pure-VPU partial reduction: (nrows,128) -> (8,128).  No cross-lane
        # XLU work and no serializing SMEM scalar chain.
        acc_ref[0] += jnp.sum(prod.reshape(-1, 8, LANES), axis=0)
        acc_ref[1] += jnp.sum(pow_sum.reshape(-1, 8, LANES), axis=0)

    def accumulate(masked):
        # Walk the big DMA'd block in SUB_ROWS chunks so in-kernel f32
        # temporaries stay small (fori_loop => buffer reuse across chunks).
        n_full = block_rows // SUB_ROWS
        rem = block_rows % SUB_ROWS
        if n_full > 0:
            def body(c, carry):
                chunk(pl.multiple_of(c * SUB_ROWS, SUB_ROWS), SUB_ROWS, masked)
                return carry
            lax.fori_loop(0, n_full, body, 0)
        if rem > 0:
            chunk(n_full * SUB_ROWS, rem, masked)

    if not tail_overhangs and not has_dup_blocks:
        accumulate(False)                     # common fast path: no masking
    elif tail_overhangs:
        @pl.when(b < last_block)
        def _():
            accumulate(False)

        @pl.when(b == last_block)
        def _():
            accumulate(True)
        # b > last_block (duplicated, clamped block): contributes nothing.
    else:  # only duplicated blocks possible, no ragged tail
        @pl.when(b <= last_block)
        def _():
            accumulate(False)


def dice_loss(predict, target, smooth=SMOOTH, p_exp=P_EXP, reduction="mean",
              max_block_rows=None, num_core_slices=None,
              target_step_bytes=TARGET_STEP_BYTES):
    assert predict.shape[0] == target.shape[0], \
        "predict & target batch size don't match"
    # Zero padding / tail masking is only benign because 0^p == 0 (p > 0).
    assert (not isinstance(p_exp, (int, float))) or p_exp > 0, \
        "p must be > 0 for padded elements to contribute zero"

    pred_flat = predict.reshape(-1)
    targ_flat = target.reshape(-1)
    # Keep native dtypes; the kernel up-casts to f32 on the fly.  bool is
    # streamed as int8 (1 B/elem) rather than promoted to bf16 in the wrapper.
    if pred_flat.dtype == jnp.bool_:
        pred_flat = pred_flat.astype(jnp.int8)
    if targ_flat.dtype == jnp.bool_:
        targ_flat = targ_flat.astype(jnp.int8)

    n = pred_flat.shape[0]
    align = ALIGN_ROWS * LANES               # 4096-element alignment
    n_pad = -(-n // align) * align
    if n_pad != n:
        # Rare; zero padding is benign (contributes 0 to both sums for p>0).
        pred_flat = jnp.pad(pred_flat, (0, n_pad - n))
        targ_flat = jnp.pad(targ_flat, (0, n_pad - n))

    rows = n_pad // LANES                    # multiple of 32
    pred2d = pred_flat.reshape(rows, LANES)
    targ2d = targ_flat.reshape(rows, LANES)

    p_item = jnp.dtype(pred2d.dtype).itemsize
    t_item = jnp.dtype(targ2d.dtype).itemsize
    gran = max(_pack_rows(pred2d.dtype), _pack_rows(targ2d.dtype))

    # Tile size: biggest block whose (double-buffered) DMA budget we planned
    # for, independent of dtype -- ~target_step_bytes per step across inputs.
    auto_rows = max(gran, target_step_bytes // (LANES * (p_item + t_item)))
    if max_block_rows is not None:
        auto_rows = min(auto_rows, int(max_block_rows))
    block_rows = min(auto_rows, rows)
    if block_rows < rows:
        # Round to the in-kernel chunk size / dtype packing granularity.
        q = SUB_ROWS if block_rows >= SUB_ROWS else gran
        block_rows = max(gran, (block_rows // q) * q)

    num_blocks = pl.cdiv(rows, block_rows)
    if num_core_slices is None:
        num_core_slices = _default_num_core_slices()
    num_slices = max(1, min(num_core_slices, num_blocks))
    bps = pl.cdiv(num_blocks, num_slices)    # blocks per core-slice
    last_block = num_blocks - 1
    has_dup = num_slices * bps > num_blocks          # clamped/duplicated blocks
    tail_overhangs = num_blocks * block_rows > rows  # last block is ragged

    if has_dup:
        def in_map(p, j):
            # Clamp so duplicated blocks DMA in-bounds data; the kernel skips
            # their accumulation entirely.
            return (jnp.minimum(p * bps + j, last_block), 0)
    else:
        def in_map(p, j):
            return (p * bps + j, 0)

    kernel = functools.partial(
        _dice_kernel, p_exp=p_exp, block_rows=block_rows,
        blocks_per_slice=bps, valid_rows=rows, last_block=last_block,
        tail_overhangs=tail_overhangs, has_dup_blocks=has_dup)

    partials = pl.pallas_call(
        kernel,
        out_shape=jax.ShapeDtypeStruct((num_slices * 2, 8, LANES), jnp.float32),
        grid_spec=pltpu.PrefetchScalarGridSpec(
            num_scalar_prefetch=0,
            grid=(num_slices, bps),
            in_specs=[
                pl.BlockSpec((block_rows, LANES), in_map),
                pl.BlockSpec((block_rows, LANES), in_map),
            ],
            out_specs=pl.BlockSpec((2, 8, LANES), lambda p, j: (p, 0, 0)),
        ),
        compiler_params=pltpu.CompilerParams(
            dimension_semantics=("parallel", "arbitrary"),
            vmem_limit_bytes=VMEM_LIMIT_BYTES,
        ),
    )(pred2d, targ2d)

    # Tiny finalize in plain JAX: combine per-slice vector accumulators.
    sums = partials.reshape(num_slices, 2, 8, LANES).sum(axis=(0, 2, 3))
    num = 2.0 * sums[0] + smooth
    den = sums[1] + smooth
    loss = 1.0 - num / den

    # As in the reference module (global flatten), the loss is a scalar, so
    # mean / sum / none all return the same value.
    if reduction in ("mean", "sum", "none"):
        return loss
    raise Exception("Unexpected reduction {}".format(reduction))


def dice_loss_ref(predict, target, smooth=SMOOTH, p_exp=P_EXP):
    # Pure-JAX reference for correctness checking (same global-flatten
    # semantics as the PyTorch module).
    p = predict.reshape(-1).astype(jnp.float32)
    t = target.reshape(-1).astype(jnp.float32)
    num = 2.0 * jnp.sum(p * t) + smooth
    den = jnp.sum(jnp.power(p, p_exp) + jnp.power(t, p_exp)) + smooth
    return 1.0 - num / den


if __name__ == "__main__":
    key = jax.random.PRNGKey(0)
    k1, k2, k3, k4 = jax.random.split(key, 4)

    # NCHW-like inputs (B, C, H, W), matching segmentation use of DiceLoss.
    x = jax.nn.sigmoid(jax.random.normal(k1, (2, 4, 16, 16), dtype=jnp.float32))
    y = (jax.random.uniform(k2, (2, 4, 16, 16)) > 0.5).astype(jnp.float32)

    ref = dice_loss_ref(x, y)
    out = jax.block_until_ready(dice_loss(x, y))
    assert jnp.allclose(out, ref, rtol=1e-5, atol=1e-5), (out, ref)

    # Multi-block / dual-slice path with a ragged overhanging tail block and a
    # duplicated (clamped) block: exercises the gated in-kernel mask.
    x2 = jax.nn.sigmoid(jax.random.normal(k3, (2, 4, 24, 24), dtype=jnp.float32))
    y2 = (jax.random.uniform(k4, (2, 4, 24, 24)) > 0.5).astype(jnp.float32)
    ref2 = dice_loss_ref(x2, y2)
    out2 = jax.block_until_ready(
        dice_loss(x2, y2, max_block_rows=24, num_core_slices=2))
    assert jnp.allclose(out2, ref2, rtol=1e-5, atol=1e-5), (out2, ref2)

    # Narrow dtypes: bf16 predictions + boolean targets streamed as int8, with
    # the in-kernel f32 up-cast.
    xb = x2.astype(jnp.bfloat16)
    yb = jax.random.uniform(k4, (2, 4, 24, 24)) > 0.5
    ref3 = dice_loss_ref(xb, yb)
    out3 = jax.block_until_ready(dice_loss(xb, yb))
    assert jnp.allclose(out3, ref3, rtol=1e-3, atol=1e-3), (out3, ref3)

    print("KERNEL_OK")
</pallas_src>

<mosaic_0001>
module attributes {stable_mosaic.version = 11 : i64} {
  func.func @_dice_kernel(%arg0: i32, %arg1: i32, %arg2: memref<32x128xf32, #tpu.memory_space<vmem>>, %arg3: memref<32x128xf32, #tpu.memory_space<vmem>>, %arg4: memref<2x8x128xf32, #tpu.memory_space<vmem>>) attributes {dimension_semantics = [#tpu.dimension_semantics<parallel>, #tpu.dimension_semantics<arbitrary>], iteration_bounds = array<i64: 1, 1>, scalar_prefetch = 0 : i64, scratch_operands = 0 : i64, tpu.core_type = #tpu.core_type<tc>, window_params = [{transform_indices = @transform_0, window_bounds = array<i64: 32, 128>}, {transform_indices = @transform_1, window_bounds = array<i64: 32, 128>}, {transform_indices = @transform_2, window_bounds = array<i64: 2, 8, 128>}]} {
    %c0_i32 = arith.constant 0 : i32
    %0 = arith.cmpi eq, %arg1, %c0_i32 : i32
    %1 = arith.extui %0 : i1 to i32
    %c0_i32_0 = arith.constant 0 : i32
    %2 = arith.cmpi ne, %1, %c0_i32_0 : i32
    scf.if %2 {
      %cst_16 = arith.constant 0.000000e+00 : f32
      %25 = vector.broadcast %cst_16 : f32 to vector<2x8x128xf32>
      %c0_17 = arith.constant 0 : index
      %c0_18 = arith.constant 0 : index
      %c0_19 = arith.constant 0 : index
      %26 = vector.load %arg4[%c0_17, %c0_18, %c0_19] : memref<2x8x128xf32, #tpu.memory_space<vmem>>, vector<2x8x128xf32>
      tpu.vector_store %arg4[%c0_17, %c0_18, %c0_19], %25 {strides = array<i32>} : memref<2x8x128xf32, #tpu.memory_space<vmem>>, vector<2x8x128xf32>,
    } else {
    }
    %c0 = arith.constant 0 : index
    %c0_1 = arith.constant 0 : index
    %3 = vector.load %arg2[%c0, %c0_1] : memref<32x128xf32, #tpu.memory_space<vmem>>, vector<32x128xf32>
    %c0_2 = arith.constant 0 : index
    %c0_3 = arith.constant 0 : index
    %4 = vector.load %arg3[%c0_2, %c0_3] : memref<32x128xf32, #tpu.memory_space<vmem>>, vector<32x128xf32>
    %5 = arith.mulf %3, %4 : vector<32x128xf32>
    %6 = arith.mulf %3, %3 : vector<32x128xf32>
    %7 = arith.mulf %4, %4 : vector<32x128xf32>
    %8 = arith.addf %6, %7 : vector<32x128xf32>
    %c0_4 = arith.constant 0 : index
    %c0_5 = arith.constant 0 : index
    %c0_6 = arith.constant 0 : index
    %9 = vector.load %arg4[%c0_4, %c0_5, %c0_6] : memref<2x8x128xf32, #tpu.memory_space<vmem>>, vector<1x8x128xf32>
    %10 = vector.shape_cast %9 : vector<1x8x128xf32> to vector<8x128xf32>
    %11 = vector.shape_cast %5 : vector<32x128xf32> to vector<4x8x128xf32>
    %cst = arith.constant dense<0.000000e+00> : vector<8x128xf32>
    %12 = vector.multi_reduction <add>, %11, %cst [0] : vector<4x8x128xf32> to vector<8x128xf32>
    %13 = arith.addf %10, %12 : vector<8x128xf32>
    %c0_7 = arith.constant 0 : index
    %c0_8 = arith.constant 0 : index
    %c0_9 = arith.constant 0 : index
    %14 = vector.load %arg4[%c0_7, %c0_8, %c0_9] : memref<2x8x128xf32, #tpu.memory_space<vmem>>, vector<1x8x128xf32>
    %15 = vector.shape_cast %14 : vector<1x8x128xf32> to vector<8x128xf32>
    %16 = vector.shape_cast %13 : vector<8x128xf32> to vector<1x8x128xf32>
    tpu.vector_store %arg4[%c0_7, %c0_8, %c0_9], %16 {strides = array<i32>} : memref<2x8x128xf32, #tpu.memory_space<vmem>>, vector<1x8x128xf32>,
    %c1 = arith.constant 1 : index
    %c0_10 = arith.constant 0 : index
    %c0_11 = arith.constant 0 : index
    %17 = vector.load %arg4[%c1, %c0_10, %c0_11] : memref<2x8x128xf32, #tpu.memory_space<vmem>>, vector<1x8x128xf32>
    %18 = vector.shape_cast %17 : vector<1x8x128xf32> to vector<8x128xf32>
    %19 = vector.shape_cast %8 : vector<32x128xf32> to vector<4x8x128xf32>
    %cst_12 = arith.constant dense<0.000000e+00> : vector<8x128xf32>
    %20 = vector.multi_reduction <add>, %19, %cst_12 [0] : vector<4x8x128xf32> to vector<8x128xf32>
    %21 = arith.addf %18, %20 : vector<8x128xf32>
    %c1_13 = arith.constant 1 : index
    %c0_14 = arith.constant 0 : index
    %c0_15 = arith.constant 0 : index
    %22 = vector.load %arg4[%c1_13, %c0_14, %c0_15] : memref<2x8x128xf32, #tpu.memory_space<vmem>>, vector<1x8x128xf32>
    %23 = vector.shape_cast %22 : vector<1x8x128xf32> to vector<8x128xf32>
    %24 = vector.shape_cast %21 : vector<8x128xf32> to vector<1x8x128xf32>
    tpu.vector_store %arg4[%c1_13, %c0_14, %c0_15], %24 {strides = array<i32>} : memref<2x8x128xf32, #tpu.memory_space<vmem>>, vector<1x8x128xf32>,
    return
  }
  func.func @transform_0(%arg0: i32, %arg1: i32) -> (i32, i32) {
    %c1_i32 = arith.constant 1 : i32
    %0 = arith.muli %arg0, %c1_i32 : i32
    %1 = arith.addi %0, %arg1 : i32
    %c0_i32 = arith.constant 0 : i32
    %c0_i32_0 = arith.constant 0 : i32
    return %1, %c0_i32 : i32, i32
  }
  func.func @transform_1(%arg0: i32, %arg1: i32) -> (i32, i32) {
    %c1_i32 = arith.constant 1 : i32
    %0 = arith.muli %arg0, %c1_i32 : i32
    %1 = arith.addi %0, %arg1 : i32
    %c0_i32 = arith.constant 0 : i32
    %c0_i32_0 = arith.constant 0 : i32
    return %1, %c0_i32 : i32, i32
  }
  func.func @transform_2(%arg0: i32, %arg1: i32) -> (i32, i32, i32) {
    %c0_i32 = arith.constant 0 : i32
    %c0_i32_0 = arith.constant 0 : i32
    %c0_i32_1 = arith.constant 0 : i32
    return %arg0, %c0_i32, %c0_i32_0 : i32, i32, i32
  }
}

</mosaic_0001>

<llo_original>
// kernel: tpu_custom_call.1
$region0: #{tpu_custom_call.1}
  #allocation0 [shape = 'u32[]', space=smem, size = 0x4, offset = 0x4, fixed_abs, tag = 'smem constant byte address 0x4 - core index']
  #allocation1 [shape = 'u32[144,128]{1,0:T(1,128)}', space=vmem, size = 0x12000, scoped, tag = 'internal scratch']
  %s0 = inlined_call_operand.hbm [shape: f32[32,128], index: 0, kind: input, shape index: {}]
  %s1 = inlined_call_operand.hbm [shape: f32[32,128], index: 1, kind: input, shape index: {}]
  %s2 = inlined_call_operand.hbm [shape: f32[2,8,128], index: 2, kind: output, shape index: {}]
  %s3 = sld [smem:[#allocation0]]
  $region30: #{tpu_custom_call.1} parent=0
    _
  %s5 = ssub.s32 1, %s3
  %s6 = scalar_select 0, %s5, %s3
  $region1: #{tpu_custom_call.1} parent=0
    #allocation2 [shape = 'u8[16384]{0}', space=vmem, size = 0x4000, scoped, tag = 'input window, operand 0, single buffered']
    #allocation3 [shape = 's32[1]{0}', space=sflag, size = 0x4, scoped, tag = 'scoped memory for tpu_custom_call.1']
    #allocation4 [shape = 's32[1]{0}', space=sflag, size = 0x4, scoped, tag = 'scoped memory for tpu_custom_call.1']
    #allocation5 [shape = 'u8[16384]{0}', space=vmem, size = 0x4000, scoped, tag = 'input window, operand 1, single buffered']
    #allocation6 [shape = 's32[1]{0}', space=sflag, size = 0x4, scoped, tag = 'scoped memory for tpu_custom_call.1']
    #allocation7 [shape = 'u8[8192]{0}', space=vmem, size = 0x2000, scoped, tag = 'output window, operand 0, single buffered']
    %7 = vsyncpa [#allocation3], 0
    %8 = vsyncpa [#allocation6], 0
    %9 = vsyncpa [#allocation4], 0
    // Predicated region
    $region2: #{tpu_custom_call.1} parent=1 // pred_check
      _
    $region3: #{tpu_custom_call.1} parent=1 // pred_check_branch
      %11 = sbr.rel (0) target = $region5
    $region4: #{tpu_custom_call.1} parent=1 // pred_region
      %s12 = sadd.s32 0, 0
      %s13 = smul.u32 4, %s12
      %s15 = ssub.s32 512, 512
      %16 = vsyncadd [#allocation3], %s15
      %s17 = smul.addr %s13, 128
      %s18 = scalar_lea.hbm %s0, %s17
      %s19 = sshll.u32 [#allocation2], 4
      %s20 = int_to_ptr.vmem [resolvable:$true] %s19
      %25 = dma.hbm_to_vmem [thread:$0]  %s18, 512, %s20, [#allocation3], 128, 128, 8
    $region5: #{tpu_custom_call.1} parent=1 // pred_fallthru
      _
    // Predicated region
    $region6: #{tpu_custom_call.1} parent=1 // pred_check
      _
    $region7: #{tpu_custom_call.1} parent=1 // pred_check_branch
      %27 = sbr.rel (0) target = $region9
    $region8: #{tpu_custom_call.1} parent=1 // pred_region
      %s28 = sadd.s32 0, 0
      %s29 = smul.u32 4, %s28
      %s31 = ssub.s32 512, 512
      %32 = vsyncadd [#allocation6], %s31
      %s33 = smul.addr %s29, 128
      %s34 = scalar_lea.hbm %s1, %s33
      %s35 = sshll.u32 [#allocation5], 4
      %s36 = int_to_ptr.vmem [resolvable:$true] %s35
      %41 = dma.hbm_to_vmem [thread:$0]  %s34, 512, %s36, [#allocation6], 128, 128, 8
    $region9: #{tpu_custom_call.1} parent=1 // pred_fallthru
      _
    // Predicated region
    $region10: #{tpu_custom_call.1} parent=1 // pred_check
      _
    $region11: #{tpu_custom_call.1} parent=1 // pred_check_branch
      %43 = sbr.rel (0) target = $region13
    $region12: #{tpu_custom_call.1} parent=1 // pred_region
      %44 = dma.done [#allocation3], 512
    $region13: #{tpu_custom_call.1} parent=1 // pred_fallthru
      _
    // Predicated region
    $region14: #{tpu_custom_call.1} parent=1 // pred_check
      _
    $region15: #{tpu_custom_call.1} parent=1 // pred_check_branch
      %46 = sbr.rel (0) target = $region17
    $region16: #{tpu_custom_call.1} parent=1 // pred_region
      %47 = dma.done [#allocation6], 512
    $region17: #{tpu_custom_call.1} parent=1 // pred_fallthru
      _
    %s48 = sadd.s32 0, 0
    %s49 = smul.u32 4, %s48
    %s50 = sadd.s32 0, 0
    %s51 = smul.u32 4, %s50
    %p52 = scmp.eq.s32.totalorder 0, 0
    // Predicated region
    $region18: #{tpu_custom_call.1} parent=1 // pred_check
      %p53 = pneg %p52
    $region19: #{tpu_custom_call.1} parent=1 // pred_check_branch
      %55 = sbr.rel (%p53) target = $region21
    $region20: #{tpu_custom_call.1} parent=1 // pred_region
      %56 = vst [vmem:[#allocation7] sm:$0xff] 0.0
      %57 = vst [vmem:[#allocation7 + $0x8] sm:$0xff] 0.0
    $region21: #{tpu_custom_call.1} parent=1 // pred_fallthru
      _
    %v58 = vld [vmem:[#allocation2] sm:$0xff]
    %v59 = vld [vmem:[#allocation2 + $0x8] sm:$0xff]
    %v60 = vld [vmem:[#allocation2 + $0x10] sm:$0xff]
    %v61 = vld [vmem:[#allocation2 + $0x18] sm:$0xff]
    %v62 = vld [vmem:[#allocation5] sm:$0xff]
    %v63 = vld [vmem:[#allocation5 + $0x8] sm:$0xff]
    %v64 = vld [vmem:[#allocation5 + $0x10] sm:$0xff]
    %v65 = vld [vmem:[#allocation5 + $0x18] sm:$0xff]
    %v66 = vmul.f32 %v58, %v62
    %v67 = vmul.f32 %v59, %v63
    %v68 = vmul.f32 %v60, %v64
    %v69 = vmul.f32 %v61, %v65
    %v70 = vmul.f32 %v58, %v58
    %v71 = vmul.f32 %v59, %v59
    %v72 = vmul.f32 %v60, %v60
    %v73 = vmul.f32 %v61, %v61
    %v74 = vmul.f32 %v62, %v62
    %v75 = vmul.f32 %v63, %v63
    %v76 = vmul.f32 %v64, %v64
    %v77 = vmul.f32 %v65, %v65
    %v78 = vadd.f32 %v70, %v74
    %v79 = vadd.f32 %v71, %v75
    %v80 = vadd.f32 %v72, %v76
    %v81 = vadd.f32 %v73, %v77
    %v82 = vld [vmem:[#allocation7] sm:$0xff]
    %v83 = vadd.f32 %v66, %v67
    %v84 = vadd.f32 %v83, %v68
    %v85 = vadd.f32 %v84, %v69
    %v86 = vadd.f32 %v82, %v85
    %87 = vst [vmem:[#allocation7] sm:$0xff] %v86
    %s88 = scalar_lea.vmem [#allocation7], 8
    %v89 = vld [vmem:[%s88] sm:$0xff]
    %v90 = vadd.f32 %v78, %v79
    %v91 = vadd.f32 %v90, %v80
    %v92 = vadd.f32 %v91, %v81
    %v93 = vadd.f32 %v89, %v92
    %94 = vst [vmem:[%s88] sm:$0xff] %v93
    // Predicated region
    $region22: #{tpu_custom_call.1} parent=1 // pred_check
      _
    $region23: #{tpu_custom_call.1} parent=1 // pred_check_branch
      %96 = sbr.rel (0) target = $region25
    $region24: #{tpu_custom_call.1} parent=1 // pred_region
      %s98 = ssub.s32 256, 256
      %99 = vsyncadd [#allocation4], %s98
      %s100 = sshll.u32 [#allocation7], 4
      %s101 = int_to_ptr.vmem [resolvable:$true] %s100
      %106 = dma.vmem_to_hbm [thread:$0]  %s101, 256, %s2, [#allocation4], 128, 128, 8
    $region25: #{tpu_custom_call.1} parent=1 // pred_fallthru
      _
    // Predicated region
    $region26: #{tpu_custom_call.1} parent=1 // pred_check
      _
    $region27: #{tpu_custom_call.1} parent=1 // pred_check_branch
      %108 = sbr.rel (0) target = $region29
    $region28: #{tpu_custom_call.1} parent=1 // pred_region
      %109 = dma.done [#allocation4], 256
    $region29: #{tpu_custom_call.1} parent=1 // pred_fallthru
      _
    %110 = vsyncpa [#allocation3], 1
    %111 = vsyncpa [#allocation6], 1
    %112 = vsyncpa [#allocation4], 1

</llo_original>
